<compile_context>
chip_gen: v5e
topology: v5e:2x2
jax: 0.10.0
libtpu: 0.0.40
codegen_flags: <defaults>
</compile_context>

<pallas_src>
import jax
import jax.numpy as jnp
from jax import lax
from jax.experimental import pallas as pl
from jax.experimental.pallas import tpu as pltpu


def mlp_kernel(x_ref, w1_ref, b1_ref, w2_ref, b2_ref, o_ref):
    # x_ref : (10, TB)   w1_ref : (10, 10)   b1_ref : (10, 1)
    # w2_ref: (5, 10)    b2_ref : (5, 1)     o_ref  : (5, TB)
    x = x_ref[...].astype(jnp.float32)
    h = jnp.dot(w1_ref[...], x,
                preferred_element_type=jnp.float32,
                precision=lax.Precision.HIGHEST)
    h = jnp.maximum(h + b1_ref[...], 0.0)                      # ReLU, column-bcast bias
    y = jnp.dot(w2_ref[...], h,
                preferred_element_type=jnp.float32,
                precision=lax.Precision.HIGHEST)
    o_ref[...] = (y + b2_ref[...]).astype(o_ref.dtype)


def toy_model_forward_t(x_t, w1, b1, w2, b2, *, block_b=32768):
    """Feature-major Pallas forward pass (no layout transposes).

    x_t : (10, B)  activations, feature-major
    w1  : (10, 10) PyTorch layout (out, in) -- used directly: y^T = W @ x^T + b
    b1  : (10,)
    w2  : (5, 10)
    b2  : (5,)
    returns (5, B), dtype of x_t (f32 accumulation internally).
    """
    D_in, B = x_t.shape
    D_hid = w1.shape[0]
    D_out = w2.shape[0]

    # Pad batch only to the 128-lane granularity; the ragged last grid block
    # (if TB does not divide B128) is masked by Pallas, not computed on garbage
    # DMA'd all the way up to a TB multiple.
    B128 = pl.cdiv(B, 128) * 128
    TB = min(pl.cdiv(block_b, 128) * 128, B128)
    if B128 != B:
        x_t = jnp.pad(x_t, ((0, 0), (0, B128 - B)))

    b1_c = b1.reshape(D_hid, 1).astype(jnp.float32)            # (10, 1)
    b2_c = b2.reshape(D_out, 1).astype(jnp.float32)            # (5, 1)

    grid = (pl.cdiv(B128, TB),)
    resident = lambda i: (0, 0)                                 # weights stay in VMEM

    itemsize = jnp.dtype(x_t.dtype).itemsize
    cost = pl.CostEstimate(
        flops=2 * B128 * (D_in * D_hid + D_hid * D_out),
        transcendentals=0,
        bytes_accessed=B128 * (D_in + D_out) * itemsize
        + (D_in * D_hid + D_hid + D_hid * D_out + D_out) * 4,
    )

    out_t = pl.pallas_call(
        mlp_kernel,
        out_shape=jax.ShapeDtypeStruct((D_out, B128), x_t.dtype),
        grid=grid,
        in_specs=[
            pl.BlockSpec((D_in, TB), lambda i: (0, i)),         # x^T, streamed
            pl.BlockSpec((D_hid, D_in), resident),              # W1
            pl.BlockSpec((D_hid, 1), resident),                 # b1
            pl.BlockSpec((D_out, D_hid), resident),             # W2
            pl.BlockSpec((D_out, 1), resident),                 # b2
        ],
        out_specs=pl.BlockSpec((D_out, TB), lambda i: (0, i)),  # y^T, lane-dense stores
        compiler_params=pltpu.CompilerParams(
            dimension_semantics=("parallel",),
            vmem_limit_bytes=32 * 1024 * 1024,                  # above v5e's 16 MiB default
        ),
        cost_estimate=cost,
    )(x_t, w1.astype(jnp.float32), b1_c, w2.astype(jnp.float32), b2_c)

    return out_t[:, :B]                                         # (5, B)


def toy_model_forward(x, w1, b1, w2, b2, *, block_b=32768):
    """PyTorch-layout convenience wrapper: (B, 10) -> (B, 5).

    Note: the transposes around the kernel cost an extra HBM round trip on a
    mem-bound op; prefer toy_model_forward_t if the surrounding model can keep
    activations feature-major.
    """
    y_t = toy_model_forward_t(jnp.transpose(x), w1, b1, w2, b2, block_b=block_b)
    return jnp.transpose(y_t)                                    # (B, 5)


def init_params(key):
    """Deterministic init mimicking nn.Linear's U(-1/sqrt(fan_in), 1/sqrt(fan_in))."""
    k1, k2, k3, k4 = jax.random.split(key, 4)
    bound1 = 1.0 / (10 ** 0.5)
    w1 = jax.random.uniform(k1, (10, 10), jnp.float32, -bound1, bound1)
    b1 = jax.random.uniform(k2, (10,), jnp.float32, -bound1, bound1)
    bound2 = 1.0 / (10 ** 0.5)
    w2 = jax.random.uniform(k3, (5, 10), jnp.float32, -bound2, bound2)
    b2 = jax.random.uniform(k4, (5,), jnp.float32, -bound2, bound2)
    return w1, b1, w2, b2


if __name__ == "__main__":
    key = jax.random.PRNGKey(0)
    kx, kp = jax.random.split(key)
    batch = 8
    x = jax.random.normal(kx, (batch, 10), jnp.float32)
    w1, b1, w2, b2 = init_params(kp)

    # jit the wrapper so the layout transposes / padding fuse around the kernel.
    fwd = jax.jit(toy_model_forward)
    out = jax.block_until_ready(fwd(x, w1, b1, w2, b2))

    # Reference check in plain JAX (same semantics as the PyTorch forward).
    ref = jnp.maximum(x @ w1.T + b1, 0.0) @ w2.T + b2
    assert out.shape == (batch, 5)
    assert jnp.allclose(out, ref, atol=1e-5, rtol=1e-5)

    # Also exercise the feature-major entry point (no wrapper transposes).
    out_t = jax.block_until_ready(
        jax.jit(toy_model_forward_t)(jnp.transpose(x), w1, b1, w2, b2))
    assert out_t.shape == (5, batch)
    assert jnp.allclose(jnp.transpose(out_t), ref, atol=1e-5, rtol=1e-5)

    print("KERNEL_OK")
</pallas_src>

<mosaic_0001>
module attributes {stable_mosaic.version = 11 : i64} {
  func.func @mlp_kernel(%arg0: i32, %arg1: memref<10x128xf32, #tpu.memory_space<vmem>>, %arg2: memref<10x10xf32, #tpu.memory_space<vmem>>, %arg3: memref<10x1xf32, #tpu.memory_space<vmem>>, %arg4: memref<5x10xf32, #tpu.memory_space<vmem>>, %arg5: memref<5x1xf32, #tpu.memory_space<vmem>>, %arg6: memref<5x128xf32, #tpu.memory_space<vmem>>) attributes {dimension_semantics = [#tpu.dimension_semantics<parallel>], iteration_bounds = array<i64: 1>, scalar_prefetch = 0 : i64, scratch_operands = 0 : i64, tpu.core_type = #tpu.core_type<tc>, window_params = [{transform_indices = @transform_0, window_bounds = array<i64: 10, 128>}, {pipeline_mode = #tpu.pipeline_mode<synchronous>, transform_indices = @transform_1, window_bounds = array<i64: 10, 10>}, {pipeline_mode = #tpu.pipeline_mode<synchronous>, transform_indices = @transform_2, window_bounds = array<i64: 10, 1>}, {pipeline_mode = #tpu.pipeline_mode<synchronous>, transform_indices = @transform_3, window_bounds = array<i64: 5, 10>}, {pipeline_mode = #tpu.pipeline_mode<synchronous>, transform_indices = @transform_4, window_bounds = array<i64: 5, 1>}, {transform_indices = @transform_5, window_bounds = array<i64: 5, 128>}]} {
    %c0 = arith.constant 0 : index
    %c0_0 = arith.constant 0 : index
    %0 = vector.load %arg1[%c0, %c0_0] : memref<10x128xf32, #tpu.memory_space<vmem>>, vector<10x128xf32>
    %c0_1 = arith.constant 0 : index
    %c0_2 = arith.constant 0 : index
    %1 = vector.load %arg2[%c0_1, %c0_2] : memref<10x10xf32, #tpu.memory_space<vmem>>, vector<10x10xf32>
    %cst = arith.constant dense<0.000000e+00> : vector<10x128xf32>
    %2 = tpu.matmul %1, %0, %cst {dimension_numbers = #tpu.dot_dimension_numbers<[1], [0], [0], [1], [0, 0, 1, 1], [], []>, precision = #tpu.contract_precision<fp32>} : vector<10x10xf32>, vector<10x128xf32>, vector<10x128xf32> -> vector<10x128xf32>
    %c0_3 = arith.constant 0 : index
    %c0_4 = arith.constant 0 : index
    %3 = vector.load %arg3[%c0_3, %c0_4] : memref<10x1xf32, #tpu.memory_space<vmem>>, vector<10x1xf32>
    %4 = vector.broadcast %3 : vector<10x1xf32> to vector<10x128xf32>
    %5 = arith.addf %2, %4 : vector<10x128xf32>
    %cst_5 = arith.constant 0.000000e+00 : f32
    %6 = vector.broadcast %cst_5 : f32 to vector<10x128xf32>
    %7 = arith.maximumf %5, %6 : vector<10x128xf32>
    %c0_6 = arith.constant 0 : index
    %c0_7 = arith.constant 0 : index
    %8 = vector.load %arg4[%c0_6, %c0_7] : memref<5x10xf32, #tpu.memory_space<vmem>>, vector<5x10xf32>
    %cst_8 = arith.constant dense<0.000000e+00> : vector<5x128xf32>
    %9 = tpu.matmul %8, %7, %cst_8 {dimension_numbers = #tpu.dot_dimension_numbers<[1], [0], [0], [1], [0, 0, 1, 1], [], []>, precision = #tpu.contract_precision<fp32>} : vector<5x10xf32>, vector<10x128xf32>, vector<5x128xf32> -> vector<5x128xf32>
    %c0_9 = arith.constant 0 : index
    %c0_10 = arith.constant 0 : index
    %10 = vector.load %arg5[%c0_9, %c0_10] : memref<5x1xf32, #tpu.memory_space<vmem>>, vector<5x1xf32>
    %11 = vector.broadcast %10 : vector<5x1xf32> to vector<5x128xf32>
    %12 = arith.addf %9, %11 : vector<5x128xf32>
    %c0_11 = arith.constant 0 : index
    %c0_12 = arith.constant 0 : index
    %13 = vector.load %arg6[%c0_11, %c0_12] : memref<5x128xf32, #tpu.memory_space<vmem>>, vector<5x128xf32>
    tpu.vector_store %arg6[%c0_11, %c0_12], %12 {strides = array<i32>} : memref<5x128xf32, #tpu.memory_space<vmem>>, vector<5x128xf32>,
    return
  }
  func.func @transform_0(%arg0: i32) -> (i32, i32) {
    %c0_i32 = arith.constant 0 : i32
    %c0_i32_0 = arith.constant 0 : i32
    return %c0_i32, %arg0 : i32, i32
  }
  func.func @transform_1(%arg0: i32) -> (i32, i32) {
    %c0_i32 = arith.constant 0 : i32
    %c0_i32_0 = arith.constant 0 : i32
    %c0_i32_1 = arith.constant 0 : i32
    return %c0_i32, %c0_i32_0 : i32, i32
  }
  func.func @transform_2(%arg0: i32) -> (i32, i32) {
    %c0_i32 = arith.constant 0 : i32
    %c0_i32_0 = arith.constant 0 : i32
    %c0_i32_1 = arith.constant 0 : i32
    return %c0_i32, %c0_i32_0 : i32, i32
  }
  func.func @transform_3(%arg0: i32) -> (i32, i32) {
    %c0_i32 = arith.constant 0 : i32
    %c0_i32_0 = arith.constant 0 : i32
    %c0_i32_1 = arith.constant 0 : i32
    return %c0_i32, %c0_i32_0 : i32, i32
  }
  func.func @transform_4(%arg0: i32) -> (i32, i32) {
    %c0_i32 = arith.constant 0 : i32
    %c0_i32_0 = arith.constant 0 : i32
    %c0_i32_1 = arith.constant 0 : i32
    return %c0_i32, %c0_i32_0 : i32, i32
  }
  func.func @transform_5(%arg0: i32) -> (i32, i32) {
    %c0_i32 = arith.constant 0 : i32
    %c0_i32_0 = arith.constant 0 : i32
    return %c0_i32, %arg0 : i32, i32
  }
}

</mosaic_0001>

<llo_original>
// kernel: toy_model_forward.1
$region0: #{toy_model_forward.1}
  #allocation0 [shape = 'u32[]', space=smem, size = 0x4, offset = 0x4, fixed_abs, tag = 'smem constant byte address 0x4 - core index']
  #allocation1 [shape = 'u32[72,128]{1,0:T(1,128)}', space=vmem, size = 0x9000, scoped, tag = 'internal scratch']
  %s0 = inlined_call_operand.vmem [shape: f32[10,128], index: 0, kind: input, shape index: {}]
  %s1 = inlined_call_operand.vmem [shape: f32[10,10], index: 1, kind: input, shape index: {}]
  %s2 = inlined_call_operand.vmem [shape: f32[10,1], index: 2, kind: input, shape index: {}]
  %s3 = inlined_call_operand.vmem [shape: f32[5,10], index: 3, kind: input, shape index: {}]
  %s4 = inlined_call_operand.vmem [shape: f32[5,1], index: 4, kind: input, shape index: {}]
  %s5 = inlined_call_operand.vmem [shape: f32[5,128], index: 5, kind: output, shape index: {}]
  %s6 = sld [smem:[#allocation0]]
  $region30: #{toy_model_forward.1} parent=0
    _
  %s8 = ssub.s32 1, %s6
  %s9 = scalar_select 0, %s8, %s6
  // Predicated region
  $region2: #{toy_model_forward.1} parent=0 // pred_check
    _
  $region3: #{toy_model_forward.1} parent=0 // pred_check_branch
    %11 = sbr.rel (0) target = $region5
  $region4: #{toy_model_forward.1} parent=0 // pred_region
    _
  $region5: #{toy_model_forward.1} parent=0 // pred_fallthru
    _
  // Predicated region
  $region6: #{toy_model_forward.1} parent=0 // pred_check
    _
  $region7: #{toy_model_forward.1} parent=0 // pred_check_branch
    %13 = sbr.rel (0) target = $region9
  $region8: #{toy_model_forward.1} parent=0 // pred_region
    _
  $region9: #{toy_model_forward.1} parent=0 // pred_fallthru
    _
  // Predicated region
  $region10: #{toy_model_forward.1} parent=0 // pred_check
    _
  $region11: #{toy_model_forward.1} parent=0 // pred_check_branch
    %15 = sbr.rel (0) target = $region13
  $region12: #{toy_model_forward.1} parent=0 // pred_region
    _
  $region13: #{toy_model_forward.1} parent=0 // pred_fallthru
    _
  // Predicated region
  $region14: #{toy_model_forward.1} parent=0 // pred_check
    _
  $region15: #{toy_model_forward.1} parent=0 // pred_check_branch
    %17 = sbr.rel (0) target = $region17
  $region16: #{toy_model_forward.1} parent=0 // pred_region
    _
  $region17: #{toy_model_forward.1} parent=0 // pred_fallthru
    _
  // Predicated region
  $region18: #{toy_model_forward.1} parent=0 // pred_check
    _
  $region19: #{toy_model_forward.1} parent=0 // pred_check_branch
    %19 = sbr.rel (0) target = $region21
  $region20: #{toy_model_forward.1} parent=0 // pred_region
    _
  $region21: #{toy_model_forward.1} parent=0 // pred_fallthru
    _
  %v20 = vld [vmem:[%s0] sm:$0xff]
  %v21 = vld [vmem:[%s0 + $0x8] sm:$0x3]
  %v22 = vld [vmem:[%s1] sm:$0xff]
  %v23 = vld [vmem:[%s1 + $0x8] sm:$0x3]
  %v24 = vld [vmem:[%s2] sm:$0xff]
  %v25 = vld [vmem:[%s2 + $0x8] sm:$0x3]
  %27 = vset.pattern.permute.xlu0 0
  %28 = vperm.xlu0 %27, %v24
  %v29 = vpop.permute.xlu0 %28
  %32 = vset.pattern.permute.xlu0 0
  %33 = vperm.xlu0 %32, %v25
  %v34 = vpop.permute.xlu0 %33
  %vm36 = vcmask 80896
  %v38 = vsel %vm36, %v22, 0
  %v41 = vsel %vm36, %v23, 0
  %vm43 = vcmask 1041408
  %v45 = vsel %vm43, %v21, 0
  %47 = vmatpush.msra.mxu0 0.0
  %48 = vmatpush.msra.mxu0 0.0
  %49 = vmatpush.msra.mxu0 0.0
  %50 = vmatpush.msra.mxu0 0.0
  %51 = vmatpush.msra.mxu0 0.0
  %52 = vmatpush.msra.mxu0 0.0
  %53 = vmatpush.msra.mxu0 0.0
  %54 = vmatpush.msra.mxu0 0.0
  %55 = vmatpush.msra.mxu0 0.0
  %56 = vmatpush.msra.mxu0 0.0
  %57 = vmatpush.msra.mxu0 0.0
  %58 = vmatpush.msra.mxu0 0.0
  %59 = vmatpush.msra.mxu0 0.0
  %60 = vmatpush.msra.mxu0 0.0
  %v61 = vand.u32 %v45, 4294901760
  %62 = vmatpush.msra.mxu0 %v61
  %v63 = vand.u32 %v20, 4294901760
  %64 = vmatpush.msra.mxu0 %v63
  %v65 = vand.u32 %v38, 4294901760
  %v66 = vsub.f32 %v38, %v65
  %v67 = vand.u32 %v66, 4294901760
  %v68 = vsub.f32 %v66, %v67
  %v69 = vand.u32 %v68, 4294901760
  %70 = vmatmul.f32.gmra.mxu0 %v69
  %v71 = vpop.f32.mrf.mxu0
  %v72 = vadd.f32 %v29, %v71
  %v73 = vand.u32 %v41, 4294901760
  %v74 = vsub.f32 %v41, %v73
  %v75 = vand.u32 %v74, 4294901760
  %v76 = vsub.f32 %v74, %v75
  %v77 = vand.u32 %v76, 4294901760
  %78 = vmatmul.f32.gmra.mxu0 %v77
  %v79 = vpop.f32.mrf.mxu0
  %v80 = vadd.f32 %v34, %v79
  %81 = vdwg.mxu0
  %82 = vmatpush.msra.mxu0 0.0
  %83 = vmatpush.msra.mxu0 0.0
  %84 = vmatpush.msra.mxu0 0.0
  %85 = vmatpush.msra.mxu0 0.0
  %86 = vmatpush.msra.mxu0 0.0
  %87 = vmatpush.msra.mxu0 0.0
  %88 = vmatpush.msra.mxu0 0.0
  %89 = vmatpush.msra.mxu0 0.0
  %90 = vmatpush.msra.mxu0 0.0
  %91 = vmatpush.msra.mxu0 0.0
  %92 = vmatpush.msra.mxu0 0.0
  %93 = vmatpush.msra.mxu0 0.0
  %94 = vmatpush.msra.mxu0 0.0
  %95 = vmatpush.msra.mxu0 0.0
  %v96 = vand.u32 %v45, 4294901760
  %v97 = vsub.f32 %v45, %v96
  %v98 = vand.u32 %v97, 4294901760
  %v99 = vsub.f32 %v97, %v98
  %v100 = vand.u32 %v99, 4294901760
  %101 = vmatpush.msra.mxu0 %v100
  %v102 = vand.u32 %v20, 4294901760
  %v103 = vsub.f32 %v20, %v102
  %v104 = vand.u32 %v103, 4294901760
  %v105 = vsub.f32 %v103, %v104
  %v106 = vand.u32 %v105, 4294901760
  %107 = vmatpush.msra.mxu0 %v106
  %v108 = vand.u32 %v38, 4294901760
  %109 = vmatmul.f32.gmra.mxu0 %v108
  %v110 = vpop.f32.mrf.mxu0
  %v111 = vadd.f32 %v72, %v110
  %v112 = vand.u32 %v41, 4294901760
  %113 = vmatmul.f32.gmra.mxu0 %v112
  %v114 = vpop.f32.mrf.mxu0
  %v115 = vadd.f32 %v80, %v114
  %116 = vdwg.mxu0
  %117 = vmatpush.msra.mxu0 0.0
  %118 = vmatpush.msra.mxu0 0.0
  %119 = vmatpush.msra.mxu0 0.0
  %120 = vmatpush.msra.mxu0 0.0
  %121 = vmatpush.msra.mxu0 0.0
  %122 = vmatpush.msra.mxu0 0.0
  %123 = vmatpush.msra.mxu0 0.0
  %124 = vmatpush.msra.mxu0 0.0
  %125 = vmatpush.msra.mxu0 0.0
  %126 = vmatpush.msra.mxu0 0.0
  %127 = vmatpush.msra.mxu0 0.0
  %128 = vmatpush.msra.mxu0 0.0
  %129 = vmatpush.msra.mxu0 0.0
  %130 = vmatpush.msra.mxu0 0.0
  %v131 = vand.u32 %v45, 4294901760
  %v132 = vsub.f32 %v45, %v131
  %133 = vmatpush.msra.mxu0 %v132
  %v134 = vand.u32 %v20, 4294901760
  %v135 = vsub.f32 %v20, %v134
  %136 = vmatpush.msra.mxu0 %v135
  %v137 = vand.u32 %v38, 4294901760
  %v138 = vsub.f32 %v38, %v137
  %139 = vmatmul.f32.gmra.mxu0 %v138
  %v140 = vpop.f32.mrf.mxu0
  %v141 = vadd.f32 %v111, %v140
  %v142 = vand.u32 %v41, 4294901760
  %v143 = vsub.f32 %v41, %v142
  %144 = vmatmul.f32.gmra.mxu0 %v143
  %v145 = vpop.f32.mrf.mxu0
  %v146 = vadd.f32 %v115, %v145
  %147 = vdwg.mxu0
  %148 = vmatpush.msra.mxu0 0.0
  %149 = vmatpush.msra.mxu0 0.0
  %150 = vmatpush.msra.mxu0 0.0
  %151 = vmatpush.msra.mxu0 0.0
  %152 = vmatpush.msra.mxu0 0.0
  %153 = vmatpush.msra.mxu0 0.0
  %154 = vmatpush.msra.mxu0 0.0
  %155 = vmatpush.msra.mxu0 0.0
  %156 = vmatpush.msra.mxu0 0.0
  %157 = vmatpush.msra.mxu0 0.0
  %158 = vmatpush.msra.mxu0 0.0
  %159 = vmatpush.msra.mxu0 0.0
  %160 = vmatpush.msra.mxu0 0.0
  %161 = vmatpush.msra.mxu0 0.0
  %v162 = vand.u32 %v45, 4294901760
  %163 = vmatpush.msra.mxu0 %v162
  %v164 = vand.u32 %v20, 4294901760
  %165 = vmatpush.msra.mxu0 %v164
  %v166 = vand.u32 %v38, 4294901760
  %v167 = vsub.f32 %v38, %v166
  %v168 = vand.u32 %v167, 4294901760
  %169 = vmatmul.f32.gmra.mxu0 %v168
  %v170 = vpop.f32.mrf.mxu0
  %v171 = vadd.f32 %v141, %v170
  %v172 = vand.u32 %v41, 4294901760
  %v173 = vsub.f32 %v41, %v172
  %v174 = vand.u32 %v173, 4294901760
  %175 = vmatmul.f32.gmra.mxu0 %v174
  %v176 = vpop.f32.mrf.mxu0
  %v177 = vadd.f32 %v146, %v176
  %178 = vdwg.mxu0
  %179 = vmatpush.msra.mxu0 0.0
  %180 = vmatpush.msra.mxu0 0.0
  %181 = vmatpush.msra.mxu0 0.0
  %182 = vmatpush.msra.mxu0 0.0
  %183 = vmatpush.msra.mxu0 0.0
  %184 = vmatpush.msra.mxu0 0.0
  %185 = vmatpush.msra.mxu0 0.0
  %186 = vmatpush.msra.mxu0 0.0
  %187 = vmatpush.msra.mxu0 0.0
  %188 = vmatpush.msra.mxu0 0.0
  %189 = vmatpush.msra.mxu0 0.0
  %190 = vmatpush.msra.mxu0 0.0
  %191 = vmatpush.msra.mxu0 0.0
  %192 = vmatpush.msra.mxu0 0.0
  %v193 = vand.u32 %v45, 4294901760
  %v194 = vsub.f32 %v45, %v193
  %v195 = vand.u32 %v194, 4294901760
  %196 = vmatpush.msra.mxu0 %v195
  %v197 = vand.u32 %v20, 4294901760
  %v198 = vsub.f32 %v20, %v197
  %v199 = vand.u32 %v198, 4294901760
  %200 = vmatpush.msra.mxu0 %v199
  %v201 = vand.u32 %v38, 4294901760
  %202 = vmatmul.f32.gmra.mxu0 %v201
  %v203 = vpop.f32.mrf.mxu0
  %v204 = vadd.f32 %v171, %v203
  %v205 = vand.u32 %v41, 4294901760
  %206 = vmatmul.f32.gmra.mxu0 %v205
  %v207 = vpop.f32.mrf.mxu0
  %v208 = vadd.f32 %v177, %v207
  %209 = vdwg.mxu0
  %210 = vmatpush.msra.mxu0 0.0
  %211 = vmatpush.msra.mxu0 0.0
  %212 = vmatpush.msra.mxu0 0.0
  %213 = vmatpush.msra.mxu0 0.0
  %214 = vmatpush.msra.mxu0 0.0
  %215 = vmatpush.msra.mxu0 0.0
  %216 = vmatpush.msra.mxu0 0.0
  %217 = vmatpush.msra.mxu0 0.0
  %218 = vmatpush.msra.mxu0 0.0
  %219 = vmatpush.msra.mxu0 0.0
  %220 = vmatpush.msra.mxu0 0.0
  %221 = vmatpush.msra.mxu0 0.0
  %222 = vmatpush.msra.mxu0 0.0
  %223 = vmatpush.msra.mxu0 0.0
  %v224 = vand.u32 %v45, 4294901760
  %225 = vmatpush.msra.mxu0 %v224
  %v226 = vand.u32 %v20, 4294901760
  %227 = vmatpush.msra.mxu0 %v226
  %v228 = vand.u32 %v38, 4294901760
  %229 = vmatmul.f32.gmra.mxu0 %v228
  %v230 = vpop.f32.mrf.mxu0
  %v231 = vadd.f32 %v204, %v230
  %v232 = vand.u32 %v41, 4294901760
  %233 = vmatmul.f32.gmra.mxu0 %v232
  %v234 = vpop.f32.mrf.mxu0
  %v235 = vadd.f32 %v208, %v234
  %236 = vdwg.mxu0
  %v237 = vmax.f32 %v231, 0.0
  %v238 = vmax.f32 %v235, 0.0
  %v239 = vld [vmem:[%s3] sm:$0x1f]
  %v240 = vld [vmem:[%s4] sm:$0x1f]
  %242 = vset.pattern.permute.xlu0 0
  %243 = vperm.xlu0 %242, %v240
  %v244 = vpop.permute.xlu0 %243
  %v247 = vsel %vm36, %v239, 0
  %v250 = vsel %vm43, %v238, 0
  %252 = vmatpush.msra.mxu0 0.0
  %253 = vmatpush.msra.mxu0 0.0
  %254 = vmatpush.msra.mxu0 0.0
  %255 = vmatpush.msra.mxu0 0.0
  %256 = vmatpush.msra.mxu0 0.0
  %257 = vmatpush.msra.mxu0 0.0
  %258 = vmatpush.msra.mxu0 0.0
  %259 = vmatpush.msra.mxu0 0.0
  %260 = vmatpush.msra.mxu0 0.0
  %261 = vmatpush.msra.mxu0 0.0
  %262 = vmatpush.msra.mxu0 0.0
  %263 = vmatpush.msra.mxu0 0.0
  %264 = vmatpush.msra.mxu0 0.0
  %265 = vmatpush.msra.mxu0 0.0
  %v266 = vand.u32 %v250, 4294901760
  %267 = vmatpush.msra.mxu0 %v266
  %v268 = vand.u32 %v237, 4294901760
  %269 = vmatpush.msra.mxu0 %v268
  %v270 = vand.u32 %v247, 4294901760
  %v271 = vsub.f32 %v247, %v270
  %v272 = vand.u32 %v271, 4294901760
  %v273 = vsub.f32 %v271, %v272
  %v274 = vand.u32 %v273, 4294901760
  %275 = vmatmul.f32.gmra.mxu0 %v274
  %v276 = vpop.f32.mrf.mxu0
  %v277 = vadd.f32 %v244, %v276
  %278 = vdwg.mxu0
  %279 = vmatpush.msra.mxu0 0.0
  %280 = vmatpush.msra.mxu0 0.0
  %281 = vmatpush.msra.mxu0 0.0
  %282 = vmatpush.msra.mxu0 0.0
  %283 = vmatpush.msra.mxu0 0.0
  %284 = vmatpush.msra.mxu0 0.0
  %285 = vmatpush.msra.mxu0 0.0
  %286 = vmatpush.msra.mxu0 0.0
  %287 = vmatpush.msra.mxu0 0.0
  %288 = vmatpush.msra.mxu0 0.0
  %289 = vmatpush.msra.mxu0 0.0
  %290 = vmatpush.msra.mxu0 0.0
  %291 = vmatpush.msra.mxu0 0.0
  %292 = vmatpush.msra.mxu0 0.0
  %v293 = vand.u32 %v250, 4294901760
  %v294 = vsub.f32 %v250, %v293
  %v295 = vand.u32 %v294, 4294901760
  %v296 = vsub.f32 %v294, %v295
  %v297 = vand.u32 %v296, 4294901760
  %298 = vmatpush.msra.mxu0 %v297
  %v299 = vand.u32 %v237, 4294901760
  %v300 = vsub.f32 %v237, %v299
  %v301 = vand.u32 %v300, 4294901760
  %v302 = vsub.f32 %v300, %v301
  %v303 = vand.u32 %v302, 4294901760
  %304 = vmatpush.msra.mxu0 %v303
  %v305 = vand.u32 %v247, 4294901760
  %306 = vmatmul.f32.gmra.mxu0 %v305
  %v307 = vpop.f32.mrf.mxu0
  %v308 = vadd.f32 %v277, %v307
  %309 = vdwg.mxu0
  %310 = vmatpush.msra.mxu0 0.0
  %311 = vmatpush.msra.mxu0 0.0
  %312 = vmatpush.msra.mxu0 0.0
  %313 = vmatpush.msra.mxu0 0.0
  %314 = vmatpush.msra.mxu0 0.0
  %315 = vmatpush.msra.mxu0 0.0
  %316 = vmatpush.msra.mxu0 0.0
  %317 = vmatpush.msra.mxu0 0.0
  %318 = vmatpush.msra.mxu0 0.0
  %319 = vmatpush.msra.mxu0 0.0
  %320 = vmatpush.msra.mxu0 0.0
  %321 = vmatpush.msra.mxu0 0.0
  %322 = vmatpush.msra.mxu0 0.0
  %323 = vmatpush.msra.mxu0 0.0
  %v324 = vand.u32 %v250, 4294901760
  %v325 = vsub.f32 %v250, %v324
  %326 = vmatpush.msra.mxu0 %v325
  %v327 = vand.u32 %v237, 4294901760
  %v328 = vsub.f32 %v237, %v327
  %329 = vmatpush.msra.mxu0 %v328
  %v330 = vand.u32 %v247, 4294901760
  %v331 = vsub.f32 %v247, %v330
  %332 = vmatmul.f32.gmra.mxu0 %v331
  %v333 = vpop.f32.mrf.mxu0
  %v334 = vadd.f32 %v308, %v333
  %335 = vdwg.mxu0
  %336 = vmatpush.msra.mxu0 0.0
  %337 = vmatpush.msra.mxu0 0.0
  %338 = vmatpush.msra.mxu0 0.0
  %339 = vmatpush.msra.mxu0 0.0
  %340 = vmatpush.msra.mxu0 0.0
  %341 = vmatpush.msra.mxu0 0.0
  %342 = vmatpush.msra.mxu0 0.0
  %343 = vmatpush.msra.mxu0 0.0
  %344 = vmatpush.msra.mxu0 0.0
  %345 = vmatpush.msra.mxu0 0.0
  %346 = vmatpush.msra.mxu0 0.0
  %347 = vmatpush.msra.mxu0 0.0
  %348 = vmatpush.msra.mxu0 0.0
  %349 = vmatpush.msra.mxu0 0.0
  %v350 = vand.u32 %v250, 4294901760
  %351 = vmatpush.msra.mxu0 %v350
  %v352 = vand.u32 %v237, 4294901760
  %353 = vmatpush.msra.mxu0 %v352
  %v354 = vand.u32 %v247, 4294901760
  %v355 = vsub.f32 %v247, %v354
  %v356 = vand.u32 %v355, 4294901760
  %357 = vmatmul.f32.gmra.mxu0 %v356
  %v358 = vpop.f32.mrf.mxu0
  %v359 = vadd.f32 %v334, %v358
  %360 = vdwg.mxu0
  %361 = vmatpush.msra.mxu0 0.0
  %362 = vmatpush.msra.mxu0 0.0
  %363 = vmatpush.msra.mxu0 0.0
  %364 = vmatpush.msra.mxu0 0.0
  %365 = vmatpush.msra.mxu0 0.0
  %366 = vmatpush.msra.mxu0 0.0
  %367 = vmatpush.msra.mxu0 0.0
  %368 = vmatpush.msra.mxu0 0.0
  %369 = vmatpush.msra.mxu0 0.0
  %370 = vmatpush.msra.mxu0 0.0
  %371 = vmatpush.msra.mxu0 0.0
  %372 = vmatpush.msra.mxu0 0.0
  %373 = vmatpush.msra.mxu0 0.0
  %374 = vmatpush.msra.mxu0 0.0
  %v375 = vand.u32 %v250, 4294901760
  %v376 = vsub.f32 %v250, %v375
  %v377 = vand.u32 %v376, 4294901760
  %378 = vmatpush.msra.mxu0 %v377
  %v379 = vand.u32 %v237, 4294901760
  %v380 = vsub.f32 %v237, %v379
  %v381 = vand.u32 %v380, 4294901760
  %382 = vmatpush.msra.mxu0 %v381
  %v383 = vand.u32 %v247, 4294901760
  %384 = vmatmul.f32.gmra.mxu0 %v383
  %v385 = vpop.f32.mrf.mxu0
  %v386 = vadd.f32 %v359, %v385
  %387 = vdwg.mxu0
  %388 = vmatpush.msra.mxu0 0.0
  %389 = vmatpush.msra.mxu0 0.0
  %390 = vmatpush.msra.mxu0 0.0
  %391 = vmatpush.msra.mxu0 0.0
  %392 = vmatpush.msra.mxu0 0.0
  %393 = vmatpush.msra.mxu0 0.0
  %394 = vmatpush.msra.mxu0 0.0
  %395 = vmatpush.msra.mxu0 0.0
  %396 = vmatpush.msra.mxu0 0.0
  %397 = vmatpush.msra.mxu0 0.0
  %398 = vmatpush.msra.mxu0 0.0
  %399 = vmatpush.msra.mxu0 0.0
  %400 = vmatpush.msra.mxu0 0.0
  %401 = vmatpush.msra.mxu0 0.0
  %v402 = vand.u32 %v250, 4294901760
  %403 = vmatpush.msra.mxu0 %v402
  %v404 = vand.u32 %v237, 4294901760
  %405 = vmatpush.msra.mxu0 %v404
  %v406 = vand.u32 %v247, 4294901760
  %407 = vmatmul.f32.gmra.mxu0 %v406
  %v408 = vpop.f32.mrf.mxu0
  %v409 = vadd.f32 %v386, %v408
  %410 = vdwg.mxu0
  %411 = vst [vmem:[%s5] sm:$0x1f] %v409
  // Predicated region
  $region22: #{toy_model_forward.1} parent=0 // pred_check
    _
  $region23: #{toy_model_forward.1} parent=0 // pred_check_branch
    %413 = sbr.rel (0) target = $region25
  $region24: #{toy_model_forward.1} parent=0 // pred_region
    _
  $region25: #{toy_model_forward.1} parent=0 // pred_fallthru
    _
  // Predicated region
  $region26: #{toy_model_forward.1} parent=0 // pred_check
    _
  $region27: #{toy_model_forward.1} parent=0 // pred_check_branch
    %415 = sbr.rel (0) target = $region29
  $region28: #{toy_model_forward.1} parent=0 // pred_region
    _
  $region29: #{toy_model_forward.1} parent=0 // pred_fallthru
    _

</llo_original>
